<compile_context>
chip_gen: v6e
topology: v6e:2x2x1
jax: 0.10.0
libtpu: 0.0.40
codegen_flags: <defaults>
</compile_context>

<pallas_src>
import functools

import jax
import jax.numpy as jnp
from jax.experimental import pallas as pl
from jax.experimental.pallas import tpu as pltpu


def _mlp_kernel(x_ref, w1_ref, bw_ref, b2_ref, o_ref, *, cast_to_bf16):
    # Load the batch tile; optional in-kernel bf16 cast (VPU, hidden under DMA).
    x = x_ref[...]
    if cast_to_bf16:
        x = x.astype(jnp.bfloat16)
    # First linear, computed transposed so the batch dim lands on lanes:
    #   h = W1 @ x^T  -> (H, block_b), f32 accumulation on the MXU.
    h = jax.lax.dot_general(
        w1_ref[...], x,
        dimension_numbers=(((1,), (1,)), ((), ())),
        preferred_element_type=jnp.float32)
    h = jnp.maximum(h + bw_ref[:, 0:1], 0.0)          # b1 (H,1) broadcast over lanes
    # TODO(synk): Dropout(p=0.7) is identity here (inference semantics only).
    # Second linear has out_features == 1 -> keep it off the MXU: VPU multiply
    # + sublane (XLU) reduce instead of an N=1 matmul.
    r = jnp.sum(h * bw_ref[:, 1:2], axis=0, keepdims=True)   # (1, block_b)
    r = r + b2_ref[0, 0]                                      # scalar bias from SMEM
    # Lane-dense store: every lane of the vreg carries one row's rating.
    o_ref[...] = (jax.nn.sigmoid(r) * 4.0 + 1.0).astype(o_ref.dtype)


def _chip_defaults():
    """(block_b cap, #TensorCores to feed) by chip generation."""
    try:
        kind = jax.devices()[0].device_kind.lower()
    except Exception:  # CPU / interpret fallback
        kind = ""
    if "v7" in kind:
        return 8192, 2    # 64 MiB VMEM but 2 TCs: keep >= 2 parallel grid steps
    if "v6" in kind:
        return 8192, 1
    if "v5" in kind:
        return 4096, 1    # ~16 MiB default scoped VMEM
    return 4096, 1


def rating_prediction_mlp(x, w1, b1, w2, b2, *, block_b=None, cast_to_bf16=True):
    """Rating head of UnifiedModel.

    Args (PyTorch-native parameter layouts, no transposing needed by callers):
      x  : (B, D)  aggregated user/item pair embeddings
      w1 : (H, D)  fc1.weight
      b1 : (H,)    fc1.bias
      w2 : (1, H)  fc2.weight
      b2 : (1,)    fc2.bias
    Returns:
      (B, 1) float32 predicted ratings in [1, 5].
    """
    B, D = x.shape
    H, D_w = w1.shape
    assert D_w == D, f"w1 must be PyTorch-layout (H, D); got {w1.shape} for D={D}"
    assert b1.shape == (H,), f"b1 must be (H,); got {b1.shape}"
    assert w2.shape == (1, H), f"w2 must be PyTorch-layout (1, H); got {w2.shape}"
    assert b2.shape == (1,), f"b2 must be (1,); got {b2.shape}"

    cap, n_cores = _chip_defaults()
    if block_b is None:
        # Lane-dense batch tile: multiple of 128, capped per-generation.  On
        # v7x the n_cores=2 divisor keeps >= 2 grid steps (megacore); on
        # v5e/v6e one big block avoids per-step overhead when B fits.
        block_b = max(128, min(cap, 128 * pl.cdiv(B, n_cores * 128)))
    assert block_b % 128 == 0, "block_b must be a multiple of 128 (lane width)"

    n_blocks = pl.cdiv(B, block_b)
    b_pad = n_blocks * block_b      # output padded; x is NOT padded (tail block
                                    # overruns harmlessly, tail outputs sliced off)

    # w1 is tiny and resident: casting it in the wrapper is free.  x is cast
    # (if requested) inside the kernel to avoid an extra XLA HBM pass.
    w1_c = w1.astype(jnp.bfloat16) if cast_to_bf16 else w1.astype(jnp.float32)
    # Pack b1 and fc2.weight into one resident (H, 2) f32 operand (one DMA).
    bw = jnp.concatenate(
        [b1.astype(jnp.float32).reshape(H, 1),
         w2.astype(jnp.float32).reshape(H, 1)], axis=1)
    b2_c = b2.astype(jnp.float32).reshape(1, 1)

    bytes_accessed = int(
        x.size * x.dtype.itemsize            # x read (no wrapper pad / cast pass)
        + w1_c.size * w1_c.dtype.itemsize    # resident weights
        + bw.size * 4 + 4                    # b1 + w2 packed, b2 scalar
        + b_pad * 4)                         # output
    cost = pl.CostEstimate(
        flops=int(2 * b_pad * D * H + 4 * b_pad * H),
        transcendentals=int(b_pad),          # sigmoid
        bytes_accessed=bytes_accessed)

    kernel = functools.partial(_mlp_kernel, cast_to_bf16=cast_to_bf16)

    out = pl.pallas_call(
        kernel,
        out_shape=jax.ShapeDtypeStruct((1, b_pad), jnp.float32),
        grid_spec=pltpu.PrefetchScalarGridSpec(
            num_scalar_prefetch=0,
            grid=(n_blocks,),
            in_specs=[
                pl.BlockSpec((block_b, D), lambda i: (i, 0)),        # x batch tile
                pl.BlockSpec((H, D), lambda i: (0, 0)),              # w1 (resident)
                pl.BlockSpec((H, 2), lambda i: (0, 0)),              # [b1 | w2]
                pl.BlockSpec(memory_space=pltpu.MemorySpace.SMEM),   # b2 scalar
            ],
            out_specs=pl.BlockSpec((1, block_b), lambda i: (0, i)),  # lane-dense out
        ),
        compiler_params=pltpu.CompilerParams(
            dimension_semantics=("parallel",),
        ),
        cost_estimate=cost,
    )(x, w1_c, bw, b2_c)

    return out[0, :B].reshape(B, 1)


def _reference(x, w1, b1, w2, b2):
    h = jnp.maximum(x @ w1.T + b1[None, :], 0.0)
    r = h @ w2.T + b2[None, :]
    return jax.nn.sigmoid(r) * 4.0 + 1.0


if __name__ == "__main__":
    key = jax.random.PRNGKey(0)
    k_x, k_w1, k_b1, k_w2, k_b2, k_x2 = jax.random.split(key, 6)

    input_dim = 16    # 2 * rgcn hidden dim (user || item embedding)
    hidden_dim = 32

    # Deterministic PyTorch-Linear-scale init, in PyTorch-native layouts.
    lim1 = 1.0 / (input_dim ** 0.5)
    lim2 = 1.0 / (hidden_dim ** 0.5)
    w1 = jax.random.uniform(k_w1, (hidden_dim, input_dim), jnp.float32, -lim1, lim1)
    b1 = jax.random.uniform(k_b1, (hidden_dim,), jnp.float32, -lim1, lim1)
    w2 = jax.random.uniform(k_w2, (1, hidden_dim), jnp.float32, -lim2, lim2)
    b2 = jax.random.uniform(k_b2, (1,), jnp.float32, -lim2, lim2)

    # Small batch of aggregated pair embeddings, f32 path (single partial block).
    B_small = 8
    x_small = jax.random.normal(k_x, (B_small, input_dim), dtype=jnp.float32)
    out_small = jax.block_until_ready(
        rating_prediction_mlp(x_small, w1, b1, w2, b2, cast_to_bf16=False))
    ref_small = _reference(x_small, w1, b1, w2, b2)
    assert out_small.shape == (B_small, 1)
    assert jnp.allclose(out_small, ref_small, atol=2e-2, rtol=1e-2), \
        "f32 mismatch vs reference"

    # Larger, non-multiple batch: exercises the unpadded tail block and the
    # in-kernel bf16 cast path.
    B_big = 300
    x_big = jax.random.normal(k_x2, (B_big, input_dim), dtype=jnp.float32)
    out_big = jax.block_until_ready(
        rating_prediction_mlp(x_big, w1, b1, w2, b2, cast_to_bf16=True))
    ref_big = _reference(x_big, w1, b1, w2, b2)
    assert out_big.shape == (B_big, 1)
    assert jnp.allclose(out_big, ref_big, atol=6e-2, rtol=3e-2), \
        "bf16 mismatch vs reference"

    # Explicit small block to force a multi-block grid (padding-free tail path).
    out_multi = jax.block_until_ready(
        rating_prediction_mlp(x_big, w1, b1, w2, b2, block_b=128,
                              cast_to_bf16=False))
    assert jnp.allclose(out_multi, ref_big, atol=2e-2, rtol=1e-2), \
        "multi-block mismatch vs reference"

    print("KERNEL_OK")
</pallas_src>

<mosaic_0001>
module attributes {stable_mosaic.version = 11 : i64} {
  func.func @_mlp_kernel(%arg0: i32, %arg1: memref<128x16xf32, #tpu.memory_space<vmem>>, %arg2: memref<32x16xf32, #tpu.memory_space<vmem>>, %arg3: memref<32x2xf32, #tpu.memory_space<vmem>>, %arg4: memref<1x1xf32, #tpu.memory_space<smem>>, %arg5: memref<1x128xf32, #tpu.memory_space<vmem>>) attributes {dimension_semantics = [#tpu.dimension_semantics<parallel>], iteration_bounds = array<i64: 1>, scalar_prefetch = 0 : i64, scratch_operands = 0 : i64, tpu.core_type = #tpu.core_type<tc>, window_params = [{transform_indices = @transform_0, window_bounds = array<i64: 128, 16>}, {pipeline_mode = #tpu.pipeline_mode<synchronous>, transform_indices = @transform_1, window_bounds = array<i64: 32, 16>}, {pipeline_mode = #tpu.pipeline_mode<synchronous>, transform_indices = @transform_2, window_bounds = array<i64: 32, 2>}, {transform_indices = @transform_3, window_bounds = array<i64: 1, 1>}, {transform_indices = @transform_4, window_bounds = array<i64: 1, 128>}]} {
    %c0 = arith.constant 0 : index
    %c0_0 = arith.constant 0 : index
    %0 = vector.load %arg1[%c0, %c0_0] : memref<128x16xf32, #tpu.memory_space<vmem>>, vector<128x16xf32>
    %c0_1 = arith.constant 0 : index
    %c0_2 = arith.constant 0 : index
    %1 = vector.load %arg2[%c0_1, %c0_2] : memref<32x16xf32, #tpu.memory_space<vmem>>, vector<32x16xf32>
    %cst = arith.constant dense<0.000000e+00> : vector<32x128xf32>
    %2 = tpu.matmul %1, %0, %cst {dimension_numbers = #tpu.dot_dimension_numbers<[1], [1], [0], [0], [0, 0, 1, 0], [], []>} : vector<32x16xf32>, vector<128x16xf32>, vector<32x128xf32> -> vector<32x128xf32>
    %c0_3 = arith.constant 0 : index
    %c0_4 = arith.constant 0 : index
    %3 = vector.load %arg3[%c0_3, %c0_4] : memref<32x2xf32, #tpu.memory_space<vmem>>, vector<32x1xf32>
    %4 = vector.broadcast %3 : vector<32x1xf32> to vector<32x128xf32>
    %5 = arith.addf %2, %4 : vector<32x128xf32>
    %cst_5 = arith.constant 0.000000e+00 : f32
    %6 = vector.broadcast %cst_5 : f32 to vector<32x128xf32>
    %7 = arith.maximumf %5, %6 : vector<32x128xf32>
    %c0_6 = arith.constant 0 : index
    %c1 = arith.constant 1 : index
    %8 = vector.load %arg3[%c0_6, %c1] : memref<32x2xf32, #tpu.memory_space<vmem>>, vector<32x1xf32>
    %9 = vector.broadcast %8 : vector<32x1xf32> to vector<32x128xf32>
    %10 = arith.mulf %7, %9 : vector<32x128xf32>
    %cst_7 = arith.constant dense<0.000000e+00> : vector<128xf32>
    %11 = vector.multi_reduction <add>, %10, %cst_7 [0] : vector<32x128xf32> to vector<128xf32>
    %12 = vector.shape_cast %11 : vector<128xf32> to vector<1x128xf32>
    %c0_8 = arith.constant 0 : index
    %c0_9 = arith.constant 0 : index
    %13 = memref.load %arg4[%c0_8, %c0_9] : memref<1x1xf32, #tpu.memory_space<smem>>
    %14 = vector.broadcast %13 : f32 to vector<1x128xf32>
    %15 = arith.addf %12, %14 : vector<1x128xf32>
    %16 = arith.negf %15 : vector<1x128xf32>
    %17 = math.exp %16 : vector<1x128xf32>
    %cst_10 = arith.constant 1.000000e+00 : f32
    %18 = vector.broadcast %cst_10 : f32 to vector<1x128xf32>
    %19 = arith.addf %18, %17 : vector<1x128xf32>
    %20 = arith.divf %18, %19 : vector<1x128xf32>
    %cst_11 = arith.constant 4.000000e+00 : f32
    %21 = vector.broadcast %cst_11 : f32 to vector<1x128xf32>
    %22 = arith.mulf %20, %21 : vector<1x128xf32>
    %cst_12 = arith.constant 1.000000e+00 : f32
    %23 = vector.broadcast %cst_12 : f32 to vector<1x128xf32>
    %24 = arith.addf %22, %23 : vector<1x128xf32>
    %c0_13 = arith.constant 0 : index
    %c0_14 = arith.constant 0 : index
    %25 = vector.load %arg5[%c0_13, %c0_14] : memref<1x128xf32, #tpu.memory_space<vmem>>, vector<1x128xf32>
    tpu.vector_store %arg5[%c0_13, %c0_14], %24 {strides = array<i32>} : memref<1x128xf32, #tpu.memory_space<vmem>>, vector<1x128xf32>,
    return
  }
  func.func @transform_0(%arg0: i32) -> (i32, i32) {
    %c0_i32 = arith.constant 0 : i32
    %c0_i32_0 = arith.constant 0 : i32
    return %arg0, %c0_i32 : i32, i32
  }
  func.func @transform_1(%arg0: i32) -> (i32, i32) {
    %c0_i32 = arith.constant 0 : i32
    %c0_i32_0 = arith.constant 0 : i32
    %c0_i32_1 = arith.constant 0 : i32
    return %c0_i32, %c0_i32_0 : i32, i32
  }
  func.func @transform_2(%arg0: i32) -> (i32, i32) {
    %c0_i32 = arith.constant 0 : i32
    %c0_i32_0 = arith.constant 0 : i32
    %c0_i32_1 = arith.constant 0 : i32
    return %c0_i32, %c0_i32_0 : i32, i32
  }
  func.func @transform_3(%arg0: i32) -> (i32, i32) {
    %c0_i32 = arith.constant 0 : i32
    %c0_i32_0 = arith.constant 0 : i32
    %c0_i32_1 = arith.constant 0 : i32
    return %c0_i32, %c0_i32_0 : i32, i32
  }
  func.func @transform_4(%arg0: i32) -> (i32, i32) {
    %c0_i32 = arith.constant 0 : i32
    %c0_i32_0 = arith.constant 0 : i32
    return %c0_i32, %arg0 : i32, i32
  }
}

</mosaic_0001>

<llo_original>
// kernel: tpu_custom_call.1
$region0: #{tpu_custom_call.1}
  #allocation0 [shape = 'u32[]', space=smem, size = 0x4, offset = 0x4, fixed_abs, tag = 'smem constant byte address 0x4 - core index']
  #allocation1 [shape = 'u32[144,128]{1,0:T(1,128)}', space=vmem, size = 0x12000, scoped, tag = 'internal scratch']
  #allocation2 [shape = 'f32[1,1]{1,0:T(1,128)S(6)}', space=smem, size = 0x200, scoped, tag = 'scoped memory for tpu_custom_call.1']
  %s0 = inlined_call_operand.vmem [shape: f32[8,16], index: 0, kind: input, shape index: {}]
  %s1 = inlined_call_operand.vmem [shape: f32[32,16], index: 1, kind: input, shape index: {}]
  %s2 = inlined_call_operand.vmem [shape: f32[32,2], index: 2, kind: input, shape index: {}]
  %s3 = inlined_call_operand.<no memory space> [shape: f32[1,1], index: 3, kind: input, shape index: {}]
  %s4 = inlined_call_operand.hbm [shape: f32[1,128], index: 4, kind: output, shape index: {}]
  %s5 = sld [smem:[#allocation0]]
  $region26: #{tpu_custom_call.1} parent=0
    _
  %s7 = ssub.s32 1, %s5
  %s8 = scalar_select 0, %s7, %s5
  %9 = sst [smem:[#allocation2]] %s3
  $region1: #{tpu_custom_call.1} parent=0
    #allocation3 [shape = 'u8[512]{0}', space=vmem, size = 0x400, scoped, tag = 'output window, operand 0, single buffered']
    #allocation4 [shape = 's32[1]{0}', space=sflag, size = 0x4, scoped, tag = 'scoped memory for tpu_custom_call.1']
    %10 = vsyncpa [#allocation4], 0
    // Predicated region
    $region2: #{tpu_custom_call.1} parent=1 // pred_check
      _
    $region3: #{tpu_custom_call.1} parent=1 // pred_check_branch
      %12 = sbr.rel (0) target = $region5
    $region4: #{tpu_custom_call.1} parent=1 // pred_region
      _
    $region5: #{tpu_custom_call.1} parent=1 // pred_fallthru
      _
    // Predicated region
    $region6: #{tpu_custom_call.1} parent=1 // pred_check
      _
    $region7: #{tpu_custom_call.1} parent=1 // pred_check_branch
      %14 = sbr.rel (0) target = $region9
    $region8: #{tpu_custom_call.1} parent=1 // pred_region
      _
    $region9: #{tpu_custom_call.1} parent=1 // pred_fallthru
      _
    // Predicated region
    $region10: #{tpu_custom_call.1} parent=1 // pred_check
      _
    $region11: #{tpu_custom_call.1} parent=1 // pred_check_branch
      %16 = sbr.rel (0) target = $region13
    $region12: #{tpu_custom_call.1} parent=1 // pred_region
      _
    $region13: #{tpu_custom_call.1} parent=1 // pred_fallthru
      _
    // Predicated region
    $region14: #{tpu_custom_call.1} parent=1 // pred_check
      _
    $region15: #{tpu_custom_call.1} parent=1 // pred_check_branch
      %18 = sbr.rel (0) target = $region17
    $region16: #{tpu_custom_call.1} parent=1 // pred_region
      _
    $region17: #{tpu_custom_call.1} parent=1 // pred_fallthru
      _
    %v19 = vld [vmem:[%s0] sm:$0xff]
    %v20 = vld [vmem:[%s0 + $0x8] sm:$0xff]
    %v21 = vld [vmem:[%s0 + $0x10] sm:$0xff]
    %v22 = vld [vmem:[%s0 + $0x18] sm:$0xff]
    %v23 = vld [vmem:[%s0 + $0x20] sm:$0xff]
    %v24 = vld [vmem:[%s0 + $0x28] sm:$0xff]
    %v25 = vld [vmem:[%s0 + $0x30] sm:$0xff]
    %v26 = vld [vmem:[%s0 + $0x38] sm:$0xff]
    %v27 = vld [vmem:[%s0 + $0x40] sm:$0xff]
    %v28 = vld [vmem:[%s0 + $0x48] sm:$0xff]
    %v29 = vld [vmem:[%s0 + $0x50] sm:$0xff]
    %v30 = vld [vmem:[%s0 + $0x58] sm:$0xff]
    %v31 = vld [vmem:[%s0 + $0x60] sm:$0xff]
    %v32 = vld [vmem:[%s0 + $0x68] sm:$0xff]
    %v33 = vld [vmem:[%s0 + $0x70] sm:$0xff]
    %v34 = vld [vmem:[%s0 + $0x78] sm:$0xff]
    %v35 = vld [vmem:[%s1] sm:$0xff]
    %v36 = vld [vmem:[%s1 + $0x8] sm:$0xff]
    %v37 = vld [vmem:[%s1 + $0x10] sm:$0xff]
    %v38 = vld [vmem:[%s1 + $0x18] sm:$0xff]
    %v39 = vld [vmem:[%s2] sm:$0xff]
    %v40 = vld [vmem:[%s2 + $0x8] sm:$0xff]
    %v41 = vld [vmem:[%s2 + $0x10] sm:$0xff]
    %v42 = vld [vmem:[%s2 + $0x18] sm:$0xff]
    %44 = vset.pattern.permute.xlu0 0
    %45 = vperm.xlu0 %44, %v39
    %v46 = vpop.permute.xlu0 %45
    %49 = vset.pattern.permute.xlu0 0
    %50 = vperm.xlu0 %49, %v40
    %v51 = vpop.permute.xlu0 %50
    %54 = vset.pattern.permute.xlu0 0
    %55 = vperm.xlu0 %54, %v41
    %v56 = vpop.permute.xlu0 %55
    %59 = vset.pattern.permute.xlu0 0
    %60 = vperm.xlu0 %59, %v42
    %v61 = vpop.permute.xlu0 %60
    %vm63 = vcmask 130048
    %v65 = vsel %vm63, %v35, 0
    %v68 = vsel %vm63, %v36, 0
    %v71 = vsel %vm63, %v37, 0
    %v74 = vsel %vm63, %v38, 0
    %v77 = vsel %vm63, %v19, 0
    %v80 = vsel %vm63, %v20, 0
    %v83 = vsel %vm63, %v21, 0
    %v86 = vsel %vm63, %v22, 0
    %v89 = vsel %vm63, %v23, 0
    %v92 = vsel %vm63, %v24, 0
    %v95 = vsel %vm63, %v25, 0
    %v98 = vsel %vm63, %v26, 0
    %v101 = vsel %vm63, %v27, 0
    %v104 = vsel %vm63, %v28, 0
    %v107 = vsel %vm63, %v29, 0
    %v110 = vsel %vm63, %v30, 0
    %v113 = vsel %vm63, %v31, 0
    %v116 = vsel %vm63, %v32, 0
    %v119 = vsel %vm63, %v33, 0
    %v122 = vsel %vm63, %v34, 0
    %124 = vmatprep.subr.mxu0 0.0
    %125 = vmatpush1.xpose.msra.mxu0 %v122
    %126 = vmatprep.subr.mxu0 0.0
    %127 = vmatpush1.xpose.msra.mxu0 %v119
    %128 = vmatprep.subr.mxu0 0.0
    %129 = vmatpush1.xpose.msra.mxu0 %v116
    %130 = vmatprep.subr.mxu0 0.0
    %131 = vmatpush1.xpose.msra.mxu0 %v113
    %132 = vmatprep.subr.mxu0 0.0
    %133 = vmatpush1.xpose.msra.mxu0 %v110
    %134 = vmatprep.subr.mxu0 0.0
    %135 = vmatpush1.xpose.msra.mxu0 %v107
    %136 = vmatprep.subr.mxu0 0.0
    %137 = vmatpush1.xpose.msra.mxu0 %v104
    %138 = vmatprep.subr.mxu0 0.0
    %139 = vmatpush1.xpose.msra.mxu0 %v101
    %140 = vmatprep.subr.mxu0 0.0
    %141 = vmatpush1.xpose.msra.mxu0 %v98
    %142 = vmatprep.subr.mxu0 0.0
    %143 = vmatpush1.xpose.msra.mxu0 %v95
    %144 = vmatprep.subr.mxu0 0.0
    %145 = vmatpush1.xpose.msra.mxu0 %v92
    %146 = vmatprep.subr.mxu0 0.0
    %147 = vmatpush1.xpose.msra.mxu0 %v89
    %148 = vmatprep.subr.mxu0 0.0
    %149 = vmatpush1.xpose.msra.mxu0 %v86
    %150 = vmatprep.subr.mxu0 0.0
    %151 = vmatpush1.xpose.msra.mxu0 %v83
    %152 = vmatprep.subr.mxu0 0.0
    %153 = vmatpush1.xpose.msra.mxu0 %v80
    %154 = vmatprep.subr.mxu0 0.0
    %155 = vmatpush1.xpose.msra.mxu0 %v77
    %156 = vmatprep.subr.mxu0 0.0
    %157 = vmatpush2.xpose.msra.mxu0 0.0
    %158 = vmatprep.subr.mxu0 0.0
    %159 = vmatpush2.xpose.msra.mxu0 0.0
    %160 = vmatprep.subr.mxu0 0.0
    %161 = vmatpush2.xpose.msra.mxu0 0.0
    %162 = vmatprep.subr.mxu0 0.0
    %163 = vmatpush2.xpose.msra.mxu0 0.0
    %164 = vmatprep.subr.mxu0 0.0
    %165 = vmatpush2.xpose.msra.mxu0 0.0
    %166 = vmatprep.subr.mxu0 0.0
    %167 = vmatpush2.xpose.msra.mxu0 0.0
    %168 = vmatprep.subr.mxu0 0.0
    %169 = vmatpush2.xpose.msra.mxu0 0.0
    %170 = vmatprep.subr.mxu0 0.0
    %171 = vmatpush2.xpose.msra.mxu0 0.0
    %172 = vmatprep.subr.mxu0 0.0
    %173 = vmatpush2.xpose.msra.mxu0 0.0
    %174 = vmatprep.subr.mxu0 0.0
    %175 = vmatpush2.xpose.msra.mxu0 0.0
    %176 = vmatprep.subr.mxu0 0.0
    %177 = vmatpush2.xpose.msra.mxu0 0.0
    %178 = vmatprep.subr.mxu0 0.0
    %179 = vmatpush2.xpose.msra.mxu0 0.0
    %180 = vmatprep.subr.mxu0 0.0
    %181 = vmatpush2.xpose.msra.mxu0 0.0
    %182 = vmatprep.subr.mxu0 0.0
    %183 = vmatpush2.xpose.msra.mxu0 0.0
    %184 = vmatprep.subr.mxu0 0.0
    %185 = vmatpush2.xpose.msra.mxu0 0.0
    %186 = vmatprep.subr.mxu0 0.0
    %187 = vmatpush2.xpose.msra.mxu0 0.0
    %188 = vmatprep.mubr.f32.mxu0 0.0
    %189 = vmatmul.mubr.f32.gmra.mxu0 %v65
    %v190 = vpop.f32.mrf.mxu0
    %v191 = vadd.f32 %v46, %v190
    %v192 = vpop.f32.mrf.mxu0
    %193 = vmatprep.mubr.f32.mxu0 0.0
    %194 = vmatmul.mubr.f32.gmra.mxu0 %v68
    %v195 = vpop.f32.mrf.mxu0
    %v196 = vadd.f32 %v51, %v195
    %v197 = vpop.f32.mrf.mxu0
    %198 = vmatprep.mubr.f32.mxu0 0.0
    %199 = vmatmul.mubr.f32.gmra.mxu0 %v71
    %v200 = vpop.f32.mrf.mxu0
    %v201 = vadd.f32 %v56, %v200
    %v202 = vpop.f32.mrf.mxu0
    %203 = vmatprep.mubr.f32.mxu0 0.0
    %204 = vmatmul.mubr.f32.gmra.mxu0 %v74
    %v205 = vpop.f32.mrf.mxu0
    %v206 = vadd.f32 %v61, %v205
    %v207 = vpop.f32.mrf.mxu0
    %208 = vdwg.mxu0
    %v209 = vmax.f32 %v191, 0.0
    %v210 = vmax.f32 %v196, 0.0
    %v211 = vmax.f32 %v201, 0.0
    %v212 = vmax.f32 %v206, 0.0
    %213 = vset.pattern.permute.xlu0 1
    %214 = vperm.xlu0 %213, %v39
    %v215 = vpop.permute.xlu0 %214
    %217 = vset.pattern.permute.xlu0 1
    %218 = vperm.xlu0 %217, %v40
    %v219 = vpop.permute.xlu0 %218
    %221 = vset.pattern.permute.xlu0 1
    %222 = vperm.xlu0 %221, %v41
    %v223 = vpop.permute.xlu0 %222
    %225 = vset.pattern.permute.xlu0 1
    %226 = vperm.xlu0 %225, %v42
    %v227 = vpop.permute.xlu0 %226
    %v229 = vmul.f32 %v209, %v215
    %v230 = vmul.f32 %v210, %v219
    %v231 = vmul.f32 %v211, %v223
    %v232 = vmul.f32 %v212, %v227
    %v233 = vadd.f32 %v229, %v230
    %v234 = vadd.f32 %v233, %v231
    %v235 = vadd.f32 %v234, %v232
    %v236 = vrot.slane %v235, 4
    %v237 = vadd.f32 %v235, %v236
    %v238 = vrot.slane %v237, 2
    %v239 = vadd.f32 %v237, %v238
    %v240 = vrot.slane %v239, 1
    %v241 = vadd.f32 %v239, %v240
    %s242 = sld [smem:[#allocation2]]
    %v243 = vstv %s242
    %v244 = vadd.f32 %v241, %v243
    %v245 = vxor.u32 %v244, 2147483648
    %v246 = vmul.f32 %v245, 1.442695
    %v247 = vpow.pop %v246
    %v248 = vadd.f32 %v247, 1.0
    %v249 = vrcp.pop %v248
    %v250 = vmul.f32 1.0, %v249
    %v251 = vmul.f32 %v250, 4.0
    %v252 = vadd.f32 %v251, 1.0
    %253 = vst [vmem:[#allocation3] sm:$0x1] %v252
    // Predicated region
    $region18: #{tpu_custom_call.1} parent=1 // pred_check
      _
    $region19: #{tpu_custom_call.1} parent=1 // pred_check_branch
      %255 = sbr.rel (0) target = $region21
    $region20: #{tpu_custom_call.1} parent=1 // pred_region
      %s257 = ssub.s32 16, 16
      %258 = vsyncadd [#allocation4], %s257
      %s260 = sshll.u32 [#allocation3], 4
      %s261 = int_to_ptr.vmem [resolvable:$true] %s260
      %263 = dma.vmem_to_hbm [thread:$0]  %s261, 16, %s4, [#allocation4]
    $region21: #{tpu_custom_call.1} parent=1 // pred_fallthru
      _
    // Predicated region
    $region22: #{tpu_custom_call.1} parent=1 // pred_check
      _
    $region23: #{tpu_custom_call.1} parent=1 // pred_check_branch
      %265 = sbr.rel (0) target = $region25
    $region24: #{tpu_custom_call.1} parent=1 // pred_region
      %266 = dma.done [#allocation4], 16
    $region25: #{tpu_custom_call.1} parent=1 // pred_fallthru
      _
    %267 = vsyncpa [#allocation4], 1

</llo_original>
